<compile_context>
chip_gen: v7x
topology: tpu7x:2x2x1
jax: 0.10.0
libtpu: 0.0.40
codegen_flags: <defaults>
</compile_context>

<pallas_src>
import functools

import jax
import jax.numpy as jnp
import numpy as np
from jax import lax
from jax.experimental import pallas as pl
from jax.experimental.pallas import tpu as pltpu


def _select_budgets():
    """Generation-aware (block_bytes, vmem_limit) with safe defaults."""
    max_block_bytes = 4 * 1024 * 1024           # safe on v7x (64 MiB VMEM)
    vmem_limit_bytes = 32 * 1024 * 1024
    try:
        vmem_cap = int(getattr(pltpu.get_tpu_info(), "vmem_capacity_bytes", 0))
        if vmem_cap >= 128 * 1024 * 1024:       # v5e / v6e
            max_block_bytes = 8 * 1024 * 1024
            vmem_limit_bytes = 64 * 1024 * 1024
    except Exception:
        pass                                    # conservative defaults work everywhere
    return max_block_bytes, vmem_limit_bytes


def _pick_tiles(nc, hw, itemsize, max_block_bytes):
    """Pick (row_tile, lane_tile) for the (N*C, H*W) view.

    Row tile is a multiple of the sublane packing (8 f32 / 16 bf16) or the full
    extent; lane tile is a multiple of 128 or the full extent.  Ragged trailing
    blocks are allowed (never fall back to an over-budget full row).
    """
    sub = max(8, 32 // max(1, itemsize))        # 8 f32, 16 bf16, 32 int8
    # Lane tile: whole row if it fits with the minimal row tile, else the
    # largest 128-multiple that fits the budget.
    if hw * sub * itemsize <= max_block_bytes:
        t = hw
    else:
        t = max(128, (max_block_bytes // (sub * itemsize)) // 128 * 128)
        if t >= hw:
            t = hw
    # Row tile: fill the remaining budget.
    tm = max(sub, (max_block_bytes // max(1, t * itemsize)) // sub * sub)
    if tm >= nc:
        tm = nc
    return tm, t


def _actnorm_stats_kernel(x_ref, sum_ref, sq_ref, *, hw, lane_tile):
    """Tiled single-pass per-row sum / sum-of-squares (f32 accumulation)."""
    j = pl.program_id(1)

    @pl.when(j == 0)
    def _zero():
        sum_ref[...] = jnp.zeros_like(sum_ref)
        sq_ref[...] = jnp.zeros_like(sq_ref)

    x = x_ref[...].astype(jnp.float32)                      # (TM, T)
    if hw % lane_tile != 0:                                 # static: ragged lane tail
        col = j * lane_tile + lax.broadcasted_iota(jnp.int32, x.shape, 1)
        x = jnp.where(col < hw, x, 0.0)
    sum_ref[...] += jnp.sum(x, axis=1, keepdims=True)       # (TM, 1)
    sq_ref[...] += jnp.sum(x * x, axis=1, keepdims=True)


def _actnorm_apply_kernel(x_ref, mult_ref, add_ref, y_ref):
    """y = x * mult + add per row (mult/add broadcast over the lane axis)."""
    x = x_ref[...].astype(mult_ref.dtype)                   # (TM, T)
    y_ref[...] = (x * mult_ref[...] + add_ref[...]).astype(y_ref.dtype)


def actnorm_forward(x_nchw, bias, logs, logdet=None, *, reverse=False,
                    inited=False, scale=1.0, donate_x=False):
    """Pallas implementation of _ActNorm.forward.

    Returns (y_nchw, logdet_out, bias_out, logs_out); bias_out / logs_out are
    the (possibly data-initialized) parameters of shape (1, C, 1, 1).
    """
    n, c, h, w = x_nchw.shape
    hw = h * w
    nc = n * c
    x2d = x_nchw.reshape(nc, hw)            # pure view of NCHW (no data movement)

    max_block_bytes, vmem_limit_bytes = _select_budgets()
    tm, t = _pick_tiles(nc, hw, x2d.dtype.itemsize, max_block_bytes)
    grid_rows = pl.cdiv(nc, tm)
    grid_hw = pl.cdiv(hw, t)

    if not inited:
        # Data-dependent init.  Per-row partial sums in-kernel; the tiny
        # reduce-over-N and the sqrt/log/`scale` finalization live in the
        # wrapper so `scale` may be a traced scalar.
        # Note: single-pass E[x^2]-E[x]^2 (f32 accumulation) avoids a second
        # HBM read; for activations with huge offsets a two-pass/Welford
        # variant would be more robust numerically.
        row_sum, row_sq = pl.pallas_call(
            functools.partial(_actnorm_stats_kernel, hw=hw, lane_tile=t),
            out_shape=(jax.ShapeDtypeStruct((nc, 1), jnp.float32),
                       jax.ShapeDtypeStruct((nc, 1), jnp.float32)),
            grid=(grid_rows, grid_hw),
            in_specs=[pl.BlockSpec((tm, t), lambda i, j: (i, j))],
            out_specs=(pl.BlockSpec((tm, 1), lambda i, j: (i, 0)),
                       pl.BlockSpec((tm, 1), lambda i, j: (i, 0))),
            compiler_params=pltpu.CompilerParams(
                dimension_semantics=("parallel", "arbitrary"),
                vmem_limit_bytes=vmem_limit_bytes),
        )(x2d)
        inv_count = 1.0 / float(n * hw)
        ch_sum = jnp.sum(row_sum.reshape(n, c), axis=0)
        ch_sq = jnp.sum(row_sq.reshape(n, c), axis=0)
        mean = ch_sum * inv_count
        var = jnp.maximum(ch_sq * inv_count - mean * mean, 0.0)
        bias_c = -mean
        logs_c = jnp.log(scale / (jnp.sqrt(var) + 1e-6))
    else:
        bias_c = bias.reshape(c).astype(jnp.float32)
        logs_c = logs.reshape(c).astype(jnp.float32)

    # Fold center+scale into a single per-channel affine (tiny JAX ops):
    #   forward: y = (x + b) * e^logs  ->  mult = e^logs,  add = b * e^logs
    #   reverse: y = x * e^-logs - b   ->  mult = e^-logs, add = -b
    if not reverse:
        mult_c = jnp.exp(logs_c)
        add_c = bias_c * mult_c
    else:
        mult_c = jnp.exp(-logs_c)
        add_c = -bias_c

    # bf16 inputs do the FMA in bf16 (bf16-native VPU on v6e/v7x); else f32.
    compute_dtype = jnp.bfloat16 if x2d.dtype == jnp.bfloat16 else jnp.float32
    mult_rows = jnp.broadcast_to(mult_c[None, :], (n, c)).reshape(nc, 1).astype(compute_dtype)
    add_rows = jnp.broadcast_to(add_c[None, :], (n, c)).reshape(nc, 1).astype(compute_dtype)

    call_kwargs = {}
    if donate_x:
        call_kwargs["input_output_aliases"] = {0: 0}   # y reuses x's HBM buffer

    y2d = pl.pallas_call(
        _actnorm_apply_kernel,
        out_shape=jax.ShapeDtypeStruct((nc, hw), x2d.dtype),
        grid=(grid_rows, grid_hw),
        in_specs=[pl.BlockSpec((tm, t), lambda i, j: (i, j)),
                  pl.BlockSpec((tm, 1), lambda i, j: (i, 0)),
                  pl.BlockSpec((tm, 1), lambda i, j: (i, 0))],
        out_specs=pl.BlockSpec((tm, t), lambda i, j: (i, j)),
        compiler_params=pltpu.CompilerParams(
            dimension_semantics=("parallel", "parallel"),
            vmem_limit_bytes=vmem_limit_bytes),
        **call_kwargs,
    )(x2d, mult_rows, add_rows)

    y_nchw = y2d.reshape(n, c, h, w)

    if logdet is None:
        logdet_out = None
    else:
        dlogdet = jnp.sum(logs_c) * float(hw)
        logdet_out = logdet + (-dlogdet if reverse else dlogdet)

    return (y_nchw, logdet_out,
            bias_c.reshape(1, c, 1, 1), logs_c.reshape(1, c, 1, 1))


def _reference_forward(x, scale=1.0):
    """Pure-JAX reference of the not-inited forward pass (sanity check)."""
    bias = -jnp.mean(x, axis=(0, 2, 3), keepdims=True)
    var = jnp.mean((x + bias) ** 2, axis=(0, 2, 3), keepdims=True)
    logs = jnp.log(scale / (jnp.sqrt(var) + 1e-6))
    y = (x + bias) * jnp.exp(logs)
    dlogdet = jnp.sum(logs) * (x.shape[2] * x.shape[3])
    return y, dlogdet, bias, logs


if __name__ == "__main__":
    key = jax.random.PRNGKey(0)
    n, c, h, w = 2, 4, 16, 16
    x = jax.random.normal(key, (n, c, h, w), dtype=jnp.float32) * 2.0 + 0.5

    # Parameters as in __init__: zeros of shape [1, num_features, 1, 1].
    bias0 = jnp.zeros((1, c, 1, 1), jnp.float32)
    logs0 = jnp.zeros((1, c, 1, 1), jnp.float32)
    logdet0 = jnp.zeros((), jnp.float32)

    # Not-yet-inited forward (data-dependent init + affine + logdet).
    y, logdet, bias_p, logs_p = actnorm_forward(
        x, bias0, logs0, logdet0, reverse=False, inited=False, scale=1.0)
    y = jax.block_until_ready(y)
    logdet = jax.block_until_ready(logdet)

    y_ref, dlogdet_ref, bias_ref, logs_ref = _reference_forward(x, scale=1.0)
    np.testing.assert_allclose(np.asarray(y), np.asarray(y_ref), rtol=1e-5, atol=1e-5)
    np.testing.assert_allclose(np.asarray(logdet), np.asarray(dlogdet_ref), rtol=1e-5, atol=1e-4)
    np.testing.assert_allclose(np.asarray(bias_p), np.asarray(bias_ref), rtol=1e-5, atol=1e-5)
    np.testing.assert_allclose(np.asarray(logs_p), np.asarray(logs_ref), rtol=1e-5, atol=1e-5)

    # Inited reverse path must invert the forward pass (y -> x, logdet -> 0).
    x_rec, logdet_rec, _, _ = actnorm_forward(
        y, bias_p, logs_p, logdet, reverse=True, inited=True, scale=1.0)
    x_rec = jax.block_until_ready(x_rec)
    np.testing.assert_allclose(np.asarray(x_rec), np.asarray(x), rtol=1e-4, atol=1e-4)
    np.testing.assert_allclose(np.asarray(logdet_rec), 0.0, atol=1e-3)

    # bf16 smoke test: exercises the bf16 FMA path (stats still accumulate in f32).
    x_bf16 = x.astype(jnp.bfloat16)
    y_bf16, _, _, _ = actnorm_forward(
        x_bf16, bias0, logs0, None, reverse=False, inited=False, scale=1.0)
    y_bf16 = jax.block_until_ready(y_bf16)
    y_ref_b, _, _, _ = _reference_forward(x_bf16.astype(jnp.float32), scale=1.0)
    np.testing.assert_allclose(np.asarray(y_bf16.astype(jnp.float32)),
                               np.asarray(y_ref_b), rtol=5e-2, atol=5e-2)

    print("KERNEL_OK")
</pallas_src>

<mosaic_0001>
module attributes {stable_mosaic.version = 11 : i64} {
  func.func @_actnorm_stats_kernel(%arg0: i32, %arg1: i32, %arg2: memref<8x256xf32, #tpu.memory_space<vmem>>, %arg3: memref<8x1xf32, #tpu.memory_space<vmem>>, %arg4: memref<8x1xf32, #tpu.memory_space<vmem>>) attributes {dimension_semantics = [#tpu.dimension_semantics<parallel>, #tpu.dimension_semantics<arbitrary>], iteration_bounds = array<i64: 1, 1>, scalar_prefetch = 0 : i64, scratch_operands = 0 : i64, tpu.core_type = #tpu.core_type<tc>, window_params = [{transform_indices = @transform_0, window_bounds = array<i64: 8, 256>}, {transform_indices = @transform_1, window_bounds = array<i64: 8, 1>}, {transform_indices = @transform_2, window_bounds = array<i64: 8, 1>}]} {
    %c0_i32 = arith.constant 0 : i32
    %0 = arith.cmpi eq, %arg1, %c0_i32 : i32
    %1 = arith.extui %0 : i1 to i32
    %c0_i32_0 = arith.constant 0 : i32
    %2 = arith.cmpi ne, %1, %c0_i32_0 : i32
    scf.if %2 {
      %cst_11 = arith.constant 0.000000e+00 : f32
      %15 = vector.broadcast %cst_11 : f32 to vector<8x1xf32>
      %c0_12 = arith.constant 0 : index
      %c0_13 = arith.constant 0 : index
      %16 = vector.load %arg3[%c0_12, %c0_13] : memref<8x1xf32, #tpu.memory_space<vmem>>, vector<8x1xf32>
      tpu.vector_store %arg3[%c0_12, %c0_13], %15 {strides = array<i32>} : memref<8x1xf32, #tpu.memory_space<vmem>>, vector<8x1xf32>,
      %cst_14 = arith.constant 0.000000e+00 : f32
      %17 = vector.broadcast %cst_14 : f32 to vector<8x1xf32>
      %c0_15 = arith.constant 0 : index
      %c0_16 = arith.constant 0 : index
      %18 = vector.load %arg4[%c0_15, %c0_16] : memref<8x1xf32, #tpu.memory_space<vmem>>, vector<8x1xf32>
      tpu.vector_store %arg4[%c0_15, %c0_16], %17 {strides = array<i32>} : memref<8x1xf32, #tpu.memory_space<vmem>>, vector<8x1xf32>,
    } else {
    }
    %c0 = arith.constant 0 : index
    %c0_1 = arith.constant 0 : index
    %3 = vector.load %arg2[%c0, %c0_1] : memref<8x256xf32, #tpu.memory_space<vmem>>, vector<8x256xf32>
    %c0_2 = arith.constant 0 : index
    %c0_3 = arith.constant 0 : index
    %4 = vector.load %arg3[%c0_2, %c0_3] : memref<8x1xf32, #tpu.memory_space<vmem>>, vector<8x1xf32>
    %cst = arith.constant dense<0.000000e+00> : vector<8xf32>
    %5 = vector.multi_reduction <add>, %3, %cst [1] : vector<8x256xf32> to vector<8xf32>
    %6 = vector.shape_cast %5 : vector<8xf32> to vector<8x1xf32>
    %7 = arith.addf %4, %6 : vector<8x1xf32>
    %c0_4 = arith.constant 0 : index
    %c0_5 = arith.constant 0 : index
    %8 = vector.load %arg3[%c0_4, %c0_5] : memref<8x1xf32, #tpu.memory_space<vmem>>, vector<8x1xf32>
    tpu.vector_store %arg3[%c0_4, %c0_5], %7 {strides = array<i32>} : memref<8x1xf32, #tpu.memory_space<vmem>>, vector<8x1xf32>,
    %c0_6 = arith.constant 0 : index
    %c0_7 = arith.constant 0 : index
    %9 = vector.load %arg4[%c0_6, %c0_7] : memref<8x1xf32, #tpu.memory_space<vmem>>, vector<8x1xf32>
    %10 = arith.mulf %3, %3 : vector<8x256xf32>
    %cst_8 = arith.constant dense<0.000000e+00> : vector<8xf32>
    %11 = vector.multi_reduction <add>, %10, %cst_8 [1] : vector<8x256xf32> to vector<8xf32>
    %12 = vector.shape_cast %11 : vector<8xf32> to vector<8x1xf32>
    %13 = arith.addf %9, %12 : vector<8x1xf32>
    %c0_9 = arith.constant 0 : index
    %c0_10 = arith.constant 0 : index
    %14 = vector.load %arg4[%c0_9, %c0_10] : memref<8x1xf32, #tpu.memory_space<vmem>>, vector<8x1xf32>
    tpu.vector_store %arg4[%c0_9, %c0_10], %13 {strides = array<i32>} : memref<8x1xf32, #tpu.memory_space<vmem>>, vector<8x1xf32>,
    return
  }
  func.func @transform_0(%arg0: i32, %arg1: i32) -> (i32, i32) {
    %c0_i32 = arith.constant 0 : i32
    return %arg0, %arg1 : i32, i32
  }
  func.func @transform_1(%arg0: i32, %arg1: i32) -> (i32, i32) {
    %c0_i32 = arith.constant 0 : i32
    %c0_i32_0 = arith.constant 0 : i32
    return %arg0, %c0_i32 : i32, i32
  }
  func.func @transform_2(%arg0: i32, %arg1: i32) -> (i32, i32) {
    %c0_i32 = arith.constant 0 : i32
    %c0_i32_0 = arith.constant 0 : i32
    return %arg0, %c0_i32 : i32, i32
  }
}

</mosaic_0001>

<llo_original>
// kernel: tpu_custom_call.1
$region0: #{tpu_custom_call.1}
  #allocation0 [shape = 'u32[]', space=smem, size = 0x4, offset = 0x4, fixed_abs, tag = 'smem constant byte address 0x4 - core index']
  #allocation1 [shape = 'u32[144,128]{1,0:T(1,128)}', space=vmem, size = 0x12000, scoped, tag = 'internal scratch']
  %s0 = inlined_call_operand.hbm [shape: f32[8,256], index: 0, kind: input, shape index: {}]
  %s1 = inlined_call_operand.vmem [shape: f32[8,1], index: 1, kind: output, shape index: {0}]
  %s2 = inlined_call_operand.vmem [shape: f32[8,1], index: 2, kind: output, shape index: {1}]
  %3 = xla_tuple %s1, %s2
  %s4 = sld [smem:[#allocation0]]
  $region30: #{tpu_custom_call.1} parent=0
    _
  %s6 = ssub.s32 1, %s4
  %s7 = scalar_select 0, %s6, %s4
  $region1: #{tpu_custom_call.1} parent=0
    #allocation2 [shape = 'u8[8192]{0}', space=vmem, size = 0x2000, scoped, tag = 'input window, operand 0, single buffered']
    #allocation3 [shape = 's32[1]{0}', space=sflag, size = 0x4, scoped, tag = 'scoped memory for tpu_custom_call.1']
    %8 = vsyncpa [#allocation3], 0
    // Predicated region
    $region2: #{tpu_custom_call.1} parent=1 // pred_check
      _
    $region3: #{tpu_custom_call.1} parent=1 // pred_check_branch
      %10 = sbr.rel (0) target = $region5
    $region4: #{tpu_custom_call.1} parent=1 // pred_region
      %s12 = ssub.s32 256, 256
      %13 = vsyncadd [#allocation3], %s12
      %s15 = sshll.u32 [#allocation2], 4
      %s16 = int_to_ptr.vmem [resolvable:$true] %s15
      %18 = dma.hbm_to_vmem [thread:$0]  %s0, 256, %s16, [#allocation3]
    $region5: #{tpu_custom_call.1} parent=1 // pred_fallthru
      _
    // Predicated region
    $region6: #{tpu_custom_call.1} parent=1 // pred_check
      _
    $region7: #{tpu_custom_call.1} parent=1 // pred_check_branch
      %20 = sbr.rel (0) target = $region9
    $region8: #{tpu_custom_call.1} parent=1 // pred_region
      %21 = dma.done [#allocation3], 256
    $region9: #{tpu_custom_call.1} parent=1 // pred_fallthru
      _
    %p22 = scmp.eq.s32.totalorder 0, 0
    // Predicated region
    $region10: #{tpu_custom_call.1} parent=1 // pred_check
      %p23 = pneg %p22
    $region11: #{tpu_custom_call.1} parent=1 // pred_check_branch
      %25 = sbr.rel (%p23) target = $region13
    $region12: #{tpu_custom_call.1} parent=1 // pred_region
      %vm26 = vcmask 7168
      %27 = vst.msk [vmem:[%s1] sm:$0xff] %vm26, 0.0
      %28 = vst.msk [vmem:[%s2] sm:$0xff] %vm26, 0.0
    $region13: #{tpu_custom_call.1} parent=1 // pred_fallthru
      _
    %v29 = vld [vmem:[#allocation2] sm:$0xff]
    %v30 = vld [vmem:[#allocation2 + $0x8] sm:$0xff]
    %v31 = vld [vmem:[%s1] sm:$0xff]
    %v32 = vadd.f32 %v29, %v30
    %33 = vadd.xlane.f32.xlu0 %v32
    %v34 = vpop.xlane.xlu0 %33
    %v35 = vadd.f32 %v31, %v34
    %vm36 = vcmask 7168
    %37 = vst.msk [vmem:[%s1] sm:$0xff] %vm36, %v35
    %v38 = vld [vmem:[%s2] sm:$0xff]
    %v39 = vmul.f32 %v29, %v29
    %v40 = vmul.f32 %v30, %v30
    %v41 = vadd.f32 %v39, %v40
    %42 = vadd.xlane.f32.xlu0 %v41
    %v43 = vpop.xlane.xlu0 %42
    %v44 = vadd.f32 %v38, %v43
    %45 = vst.msk [vmem:[%s2] sm:$0xff] %vm36, %v44
    // Predicated region
    $region14: #{tpu_custom_call.1} parent=1 // pred_check
      _
    $region15: #{tpu_custom_call.1} parent=1 // pred_check_branch
      %47 = sbr.rel (0) target = $region17
    $region16: #{tpu_custom_call.1} parent=1 // pred_region
      _
    $region17: #{tpu_custom_call.1} parent=1 // pred_fallthru
      _
    // Predicated region
    $region18: #{tpu_custom_call.1} parent=1 // pred_check
      _
    $region19: #{tpu_custom_call.1} parent=1 // pred_check_branch
      %49 = sbr.rel (0) target = $region21
    $region20: #{tpu_custom_call.1} parent=1 // pred_region
      _
    $region21: #{tpu_custom_call.1} parent=1 // pred_fallthru
      _
    // Predicated region
    $region22: #{tpu_custom_call.1} parent=1 // pred_check
      _
    $region23: #{tpu_custom_call.1} parent=1 // pred_check_branch
      %51 = sbr.rel (0) target = $region25
    $region24: #{tpu_custom_call.1} parent=1 // pred_region
      _
    $region25: #{tpu_custom_call.1} parent=1 // pred_fallthru
      _
    // Predicated region
    $region26: #{tpu_custom_call.1} parent=1 // pred_check
      _
    $region27: #{tpu_custom_call.1} parent=1 // pred_check_branch
      %53 = sbr.rel (0) target = $region29
    $region28: #{tpu_custom_call.1} parent=1 // pred_region
      _
    $region29: #{tpu_custom_call.1} parent=1 // pred_fallthru
      _
    %54 = vsyncpa [#allocation3], 1

</llo_original>
